<compile_context>
chip_gen: v6e
topology: v6e:2x2x1
jax: 0.10.0
libtpu: 0.0.40
codegen_flags: <defaults>
</compile_context>

<pallas_src>
import functools

import jax
import jax.numpy as jnp
from jax.experimental import pallas as pl
from jax.experimental.pallas import tpu as pltpu


def _round_up(x, m):
    return -(-x // m) * m


def _net2_rnn_kernel(w_recT_ref, w_aug_ref, aug_ref, out_ref, state_ref, *,
                     alpha, tb):
    """One grid cell = `tb` recurrence steps for one (batch block, time block).

    w_recT_ref: (Npad, Npad) bf16  pre-transposed recurrent weights (resident).
    w_aug_ref:  (Kp, Npad)   f32   [[W_in.T],[I_N]]: fused input proj + noise.
    aug_ref:    (tb, Bb, Kp) f32   time-major [u_t, noise_t] rows.
    out_ref:    (tb, Bb, Npad) f32 time-major states (row g = s_g, pre-update).
    state_ref:  (Bb, Npad)   f32   carried hidden state for this batch block.
    """
    # New batch block (time-block index 0): reset the carried state to zero.
    @pl.when(pl.program_id(1) == 0)
    def _():
        state_ref[...] = jnp.zeros_like(state_ref)

    w_rec = w_recT_ref[...]            # loop-invariant, hoisted (bf16)
    w_aug = w_aug_ref[...]             # loop-invariant, hoisted (f32)

    s = state_ref[...]                 # (Bb, Npad) f32 carried state
    # Static unroll: only `s` is live across iterations (outputs stream straight
    # to out_ref per step), so vreg pressure stays ~constant with tb; tb is
    # capped in the wrapper so code size stays bounded.
    for t in range(tb):
        # Pre-update write: global row c*tb+t holds s_{c*tb+t}; row 0 is the
        # zero initial state, so no wrapper-side concatenate is needed.
        out_ref[t] = s
        # Fused input projection + noise:  drive_t = [u_t, noise_t] @ W_aug.
        drive = jnp.dot(aug_ref[t], w_aug, preferred_element_type=jnp.float32)
        # Recurrent matmul with bf16 operands (native MXU rate), f32 accumulate.
        pre = jnp.dot(s.astype(jnp.bfloat16), w_rec,
                      preferred_element_type=jnp.float32) + drive
        s = (1.0 - alpha) * s + alpha * jnp.maximum(pre, 0.0)     # ReLU
    state_ref[...] = s


def net2_forward(u, noise, w_rec, w_in, *, alpha, time_block=32,
                 batch_block=128, interpret=False):
    """Net2.forward. u: (B,T,I); noise: (B,T,N) pre-scaled. Returns (B,T,N) f32."""
    B, T, I = u.shape
    N = w_rec.shape[0]
    assert noise.shape == (B, T, N)
    f32 = jnp.float32

    LANE, SUB = 128, 8
    Npad = _round_up(N, LANE)                               # lane-dense hidden dim
    Bb = min(_round_up(B, SUB), max(SUB, _round_up(batch_block, SUB)))
    Bp = _round_up(B, Bb)
    nb = Bp // Bb
    tb = max(SUB, min(_round_up(time_block, SUB), _round_up(T, SUB)))
    tb = min(tb, 64)                                        # bound unrolled body
    nt = pl.cdiv(T, tb)
    T_pad = nt * tb

    K = I + N
    Kp = _round_up(K, SUB)

    # Augmented per-step inputs, time-major: aug[t, b] = [u[b,t,:], noise[b,t,:]].
    aug = jnp.concatenate([u.astype(f32), noise.astype(f32)], axis=-1)   # (B,T,K)
    aug = jnp.transpose(aug, (1, 0, 2))                                  # (T,B,K)
    aug = jnp.pad(aug, ((0, T_pad - T), (0, Bp - B), (0, Kp - K)))

    # W_aug = [[W_in.T],[I_N]] zero-padded:  aug_t @ W_aug = u_t @ W_in.T + noise_t.
    w_aug = jnp.zeros((Kp, Npad), f32)
    w_aug = w_aug.at[:I, :N].set(jnp.asarray(w_in, f32).T)
    w_aug = w_aug.at[I:I + N, :N].set(jnp.eye(N, dtype=f32))

    # Recurrent weights: transpose once, lane-pad, bf16 for native MXU rate.
    w_recT = jnp.zeros((Npad, Npad), f32).at[:N, :N].set(jnp.asarray(w_rec, f32).T)
    w_recT = w_recT.astype(jnp.bfloat16)

    # Advisory cost estimate for XLA's scheduler around this custom call.
    flops = int(2 * Bp * T_pad * Npad * (Npad + Kp) + 5 * Bp * T_pad * Npad)
    bytes_accessed = int(4 * (aug.size + Bp * T_pad * Npad + Kp * Npad)
                         + 2 * Npad * Npad)
    cost = pl.CostEstimate(flops=flops, transcendentals=0,
                           bytes_accessed=bytes_accessed)

    # VMEM: resident weights + double-buffered aug/out blocks + state + headroom.
    need = (2 * Npad * Npad + 4 * Kp * Npad + 4 * Bb * Npad
            + 2 * 4 * tb * Bb * (Kp + Npad) + (4 << 20))
    try:
        vmem_cap = int(pltpu.get_tpu_info().vmem_capacity_bytes)
    except Exception:
        vmem_cap = 64 << 20                    # conservative: v7x per-core VMEM
    vmem_limit = max(16 << 20, min(int(need), (vmem_cap * 3) // 4))

    kernel = functools.partial(_net2_rnn_kernel, alpha=float(alpha), tb=tb)
    out_tm = pl.pallas_call(
        kernel,
        out_shape=jax.ShapeDtypeStruct((T_pad, Bp, Npad), f32),
        grid_spec=pltpu.PrefetchScalarGridSpec(
            num_scalar_prefetch=0,
            grid=(nb, nt),
            in_specs=[
                pl.BlockSpec((Npad, Npad), lambda b, t: (0, 0)),      # W_rec.T
                pl.BlockSpec((Kp, Npad), lambda b, t: (0, 0)),        # W_aug
                pl.BlockSpec((tb, Bb, Kp), lambda b, t: (t, b, 0)),   # aug chunk
            ],
            out_specs=pl.BlockSpec((tb, Bb, Npad), lambda b, t: (t, b, 0)),
            scratch_shapes=[pltpu.VMEM((Bb, Npad), f32)],
        ),
        compiler_params=pltpu.CompilerParams(
            # Batch blocks are independent (v7x megacore); time is sequential.
            dimension_semantics=("parallel", "arbitrary"),
            vmem_limit_bytes=int(vmem_limit)),
        cost_estimate=cost,
        interpret=interpret,
    )(w_recT, w_aug, aug)

    # Back to (B, T, N); the zero t=0 row came straight out of the kernel.
    return jnp.transpose(out_tm[:T, :B, :N], (1, 0, 2))


def net2_forward_ref(u, noise, w_rec, w_in, *, alpha):
    """Pure-JAX reference mirroring the PyTorch loop (f32 everywhere)."""
    B, T, _ = u.shape
    N = w_rec.shape[0]
    s = jnp.zeros((B, N), jnp.float32)
    states = [s]
    for i in range(T - 1):
        pre = s @ w_rec.T + u[:, i, :] @ w_in.T + noise[:, i, :]
        s = (1.0 - alpha) * s + alpha * jnp.maximum(pre, 0.0)
        states.append(s)
    return jnp.stack(states, axis=1)


if __name__ == "__main__":
    # Small shapes consistent with Net2(n=32, input_size=6, output_size=2).
    B, T, N = 2, 8, 32
    input_size, output_size = 6, 2
    alpha, sigma_rec = 0.2, 0.15

    key = jax.random.PRNGKey(0)
    k_u, k_noise, k_rec, k_in, k_out = jax.random.split(key, 5)

    # nn.Linear-style uniform init, then connectivity_constraints():
    # relu on input/output weights (dale=False).
    bound_rec = 1.0 / jnp.sqrt(N)
    bound_in = 1.0 / jnp.sqrt(input_size)
    bound_out = 1.0 / jnp.sqrt(N)
    w_rec = jax.random.uniform(k_rec, (N, N), jnp.float32, -bound_rec, bound_rec)
    w_in = jnp.maximum(
        jax.random.uniform(k_in, (N, input_size), jnp.float32, -bound_in, bound_in), 0.0)
    w_out = jnp.maximum(  # not used in forward(); kept for parity with __init__
        jax.random.uniform(k_out, (output_size, N), jnp.float32, -bound_out, bound_out), 0.0)

    u = jax.random.normal(k_u, (B, T, input_size), jnp.float32)
    # noise = sqrt(2*alpha*sigma_rec**2) * N(0, 1)  (the module draws this internally)
    noise = jnp.sqrt(2.0 * alpha * sigma_rec ** 2) * jax.random.normal(
        k_noise, (B, T, N), jnp.float32)

    fwd = jax.jit(functools.partial(net2_forward, alpha=alpha))
    states = jax.block_until_ready(fwd(u, noise, w_rec, w_in))
    ref = net2_forward_ref(u, noise, w_rec, w_in, alpha=alpha)
    assert states.shape == (B, T, N)
    # The recurrent matmul intentionally runs with bf16 MXU operands (f32
    # accumulate / f32 carried state), so compare with a correspondingly
    # relaxed tolerance.
    assert jnp.allclose(states, ref, atol=1e-2, rtol=1e-2), "mismatch vs reference"

    # Second config: exercises batch/time padding, multiple time chunks and the
    # parallel batch-block grid axis (v7x megacore path).
    B2, T2 = 10, 41
    u2 = jax.random.normal(jax.random.fold_in(key, 1), (B2, T2, input_size), jnp.float32)
    noise2 = jnp.sqrt(2.0 * alpha * sigma_rec ** 2) * jax.random.normal(
        jax.random.fold_in(key, 2), (B2, T2, N), jnp.float32)
    fwd2 = jax.jit(functools.partial(net2_forward, alpha=alpha,
                                     batch_block=8, time_block=16))
    states2 = jax.block_until_ready(fwd2(u2, noise2, w_rec, w_in))
    ref2 = net2_forward_ref(u2, noise2, w_rec, w_in, alpha=alpha)
    assert states2.shape == (B2, T2, N)
    assert jnp.allclose(states2, ref2, atol=1e-2, rtol=1e-2), "mismatch vs reference (2)"

    print("KERNEL_OK")
</pallas_src>

<mosaic_0001>
module attributes {stable_mosaic.version = 11 : i64} {
  func.func @_net2_rnn_kernel(%arg0: i32, %arg1: i32, %arg2: memref<128x128xbf16, #tpu.memory_space<vmem>>, %arg3: memref<40x128xf32, #tpu.memory_space<vmem>>, %arg4: memref<8x8x40xf32, #tpu.memory_space<vmem>>, %arg5: memref<8x8x128xf32, #tpu.memory_space<vmem>>, %arg6: memref<8x128xf32, #tpu.memory_space<vmem>>) attributes {dimension_semantics = [#tpu.dimension_semantics<parallel>, #tpu.dimension_semantics<arbitrary>], iteration_bounds = array<i64: 1, 1>, scalar_prefetch = 0 : i64, scratch_operands = 1 : i64, tpu.core_type = #tpu.core_type<tc>, window_params = [{pipeline_mode = #tpu.pipeline_mode<synchronous>, transform_indices = @transform_0, window_bounds = array<i64: 128, 128>}, {pipeline_mode = #tpu.pipeline_mode<synchronous>, transform_indices = @transform_1, window_bounds = array<i64: 40, 128>}, {transform_indices = @transform_2, window_bounds = array<i64: 8, 8, 40>}, {transform_indices = @transform_3, window_bounds = array<i64: 8, 8, 128>}]} {
    %c0_i32 = arith.constant 0 : i32
    %0 = arith.cmpi eq, %arg1, %c0_i32 : i32
    %1 = arith.extui %0 : i1 to i32
    %c0_i32_0 = arith.constant 0 : i32
    %2 = arith.cmpi ne, %1, %c0_i32_0 : i32
    scf.if %2 {
      %cst_88 = arith.constant 0.000000e+00 : f32
      %135 = vector.broadcast %cst_88 : f32 to vector<8x128xf32>
      %c0_89 = arith.constant 0 : index
      %c0_90 = arith.constant 0 : index
      %136 = vector.load %arg6[%c0_89, %c0_90] : memref<8x128xf32, #tpu.memory_space<vmem>>, vector<8x128xf32>
      tpu.vector_store %arg6[%c0_89, %c0_90], %135 {strides = array<i32>} : memref<8x128xf32, #tpu.memory_space<vmem>>, vector<8x128xf32>,
    } else {
    }
    %c0 = arith.constant 0 : index
    %c0_1 = arith.constant 0 : index
    %3 = vector.load %arg2[%c0, %c0_1] : memref<128x128xbf16, #tpu.memory_space<vmem>>, vector<128x128xbf16>
    %c0_2 = arith.constant 0 : index
    %c0_3 = arith.constant 0 : index
    %4 = vector.load %arg3[%c0_2, %c0_3] : memref<40x128xf32, #tpu.memory_space<vmem>>, vector<40x128xf32>
    %c0_4 = arith.constant 0 : index
    %c0_5 = arith.constant 0 : index
    %5 = vector.load %arg6[%c0_4, %c0_5] : memref<8x128xf32, #tpu.memory_space<vmem>>, vector<8x128xf32>
    %c0_6 = arith.constant 0 : index
    %c0_7 = arith.constant 0 : index
    %c0_8 = arith.constant 0 : index
    %6 = vector.load %arg5[%c0_6, %c0_7, %c0_8] : memref<8x8x128xf32, #tpu.memory_space<vmem>>, vector<1x8x128xf32>
    %7 = vector.shape_cast %6 : vector<1x8x128xf32> to vector<8x128xf32>
    %8 = vector.shape_cast %5 : vector<8x128xf32> to vector<1x8x128xf32>
    tpu.vector_store %arg5[%c0_6, %c0_7, %c0_8], %8 {strides = array<i32>} : memref<8x8x128xf32, #tpu.memory_space<vmem>>, vector<1x8x128xf32>,
    %c0_9 = arith.constant 0 : index
    %c0_10 = arith.constant 0 : index
    %c0_11 = arith.constant 0 : index
    %9 = vector.load %arg4[%c0_9, %c0_10, %c0_11] : memref<8x8x40xf32, #tpu.memory_space<vmem>>, vector<1x8x40xf32>
    %10 = vector.shape_cast %9 : vector<1x8x40xf32> to vector<8x40xf32>
    %cst = arith.constant dense<0.000000e+00> : vector<8x128xf32>
    %11 = tpu.matmul %10, %4, %cst {dimension_numbers = #tpu.dot_dimension_numbers<[1], [0], [0], [1], [0, 0, 1, 1], [], []>} : vector<8x40xf32>, vector<40x128xf32>, vector<8x128xf32> -> vector<8x128xf32>
    %12 = arith.truncf %5 : vector<8x128xf32> to vector<8x128xbf16>
    %cst_12 = arith.constant dense<0.000000e+00> : vector<8x128xf32>
    %13 = tpu.matmul %12, %3, %cst_12 {dimension_numbers = #tpu.dot_dimension_numbers<[1], [0], [0], [1], [0, 0, 1, 1], [], []>} : vector<8x128xbf16>, vector<128x128xbf16>, vector<8x128xf32> -> vector<8x128xf32>
    %14 = arith.addf %13, %11 : vector<8x128xf32>
    %cst_13 = arith.constant 8.000000e-01 : f32
    %15 = vector.broadcast %cst_13 : f32 to vector<8x128xf32>
    %16 = arith.mulf %15, %5 : vector<8x128xf32>
    %cst_14 = arith.constant 0.000000e+00 : f32
    %17 = vector.broadcast %cst_14 : f32 to vector<8x128xf32>
    %18 = arith.maximumf %14, %17 : vector<8x128xf32>
    %cst_15 = arith.constant 2.000000e-01 : f32
    %19 = vector.broadcast %cst_15 : f32 to vector<8x128xf32>
    %20 = arith.mulf %19, %18 : vector<8x128xf32>
    %21 = arith.addf %16, %20 : vector<8x128xf32>
    %c1 = arith.constant 1 : index
    %c0_16 = arith.constant 0 : index
    %c0_17 = arith.constant 0 : index
    %22 = vector.load %arg5[%c1, %c0_16, %c0_17] : memref<8x8x128xf32, #tpu.memory_space<vmem>>, vector<1x8x128xf32>
    %23 = vector.shape_cast %22 : vector<1x8x128xf32> to vector<8x128xf32>
    %24 = vector.shape_cast %21 : vector<8x128xf32> to vector<1x8x128xf32>
    tpu.vector_store %arg5[%c1, %c0_16, %c0_17], %24 {strides = array<i32>} : memref<8x8x128xf32, #tpu.memory_space<vmem>>, vector<1x8x128xf32>,
    %c1_18 = arith.constant 1 : index
    %c0_19 = arith.constant 0 : index
    %c0_20 = arith.constant 0 : index
    %25 = vector.load %arg4[%c1_18, %c0_19, %c0_20] : memref<8x8x40xf32, #tpu.memory_space<vmem>>, vector<1x8x40xf32>
    %26 = vector.shape_cast %25 : vector<1x8x40xf32> to vector<8x40xf32>
    %cst_21 = arith.constant dense<0.000000e+00> : vector<8x128xf32>
    %27 = tpu.matmul %26, %4, %cst_21 {dimension_numbers = #tpu.dot_dimension_numbers<[1], [0], [0], [1], [0, 0, 1, 1], [], []>} : vector<8x40xf32>, vector<40x128xf32>, vector<8x128xf32> -> vector<8x128xf32>
    %28 = arith.truncf %21 : vector<8x128xf32> to vector<8x128xbf16>
    %cst_22 = arith.constant dense<0.000000e+00> : vector<8x128xf32>
    %29 = tpu.matmul %28, %3, %cst_22 {dimension_numbers = #tpu.dot_dimension_numbers<[1], [0], [0], [1], [0, 0, 1, 1], [], []>} : vector<8x128xbf16>, vector<128x128xbf16>, vector<8x128xf32> -> vector<8x128xf32>
    %30 = arith.addf %29, %27 : vector<8x128xf32>
    %cst_23 = arith.constant 8.000000e-01 : f32
    %31 = vector.broadcast %cst_23 : f32 to vector<8x128xf32>
    %32 = arith.mulf %31, %21 : vector<8x128xf32>
    %cst_24 = arith.constant 0.000000e+00 : f32
    %33 = vector.broadcast %cst_24 : f32 to vector<8x128xf32>
    %34 = arith.maximumf %30, %33 : vector<8x128xf32>
    %cst_25 = arith.constant 2.000000e-01 : f32
    %35 = vector.broadcast %cst_25 : f32 to vector<8x128xf32>
    %36 = arith.mulf %35, %34 : vector<8x128xf32>
    %37 = arith.addf %32, %36 : vector<8x128xf32>
    %c2 = arith.constant 2 : index
    %c0_26 = arith.constant 0 : index
    %c0_27 = arith.constant 0 : index
    %38 = vector.load %arg5[%c2, %c0_26, %c0_27] : memref<8x8x128xf32, #tpu.memory_space<vmem>>, vector<1x8x128xf32>
    %39 = vector.shape_cast %38 : vector<1x8x128xf32> to vector<8x128xf32>
    %40 = vector.shape_cast %37 : vector<8x128xf32> to vector<1x8x128xf32>
    tpu.vector_store %arg5[%c2, %c0_26, %c0_27], %40 {strides = array<i32>} : memref<8x8x128xf32, #tpu.memory_space<vmem>>, vector<1x8x128xf32>,
    %c2_28 = arith.constant 2 : index
    %c0_29 = arith.constant 0 : index
    %c0_30 = arith.constant 0 : index
    %41 = vector.load %arg4[%c2_28, %c0_29, %c0_30] : memref<8x8x40xf32, #tpu.memory_space<vmem>>, vector<1x8x40xf32>
    %42 = vector.shape_cast %41 : vector<1x8x40xf32> to vector<8x40xf32>
    %cst_31 = arith.constant dense<0.000000e+00> : vector<8x128xf32>
    %43 = tpu.matmul %42, %4, %cst_31 {dimension_numbers = #tpu.dot_dimension_numbers<[1], [0], [0], [1], [0, 0, 1, 1], [], []>} : vector<8x40xf32>, vector<40x128xf32>, vector<8x128xf32> -> vector<8x128xf32>
    %44 = arith.truncf %37 : vector<8x128xf32> to vector<8x128xbf16>
    %cst_32 = arith.constant dense<0.000000e+00> : vector<8x128xf32>
    %45 = tpu.matmul %44, %3, %cst_32 {dimension_numbers = #tpu.dot_dimension_numbers<[1], [0], [0], [1], [0, 0, 1, 1], [], []>} : vector<8x128xbf16>, vector<128x128xbf16>, vector<8x128xf32> -> vector<8x128xf32>
    %46 = arith.addf %45, %43 : vector<8x128xf32>
    %cst_33 = arith.constant 8.000000e-01 : f32
    %47 = vector.broadcast %cst_33 : f32 to vector<8x128xf32>
    %48 = arith.mulf %47, %37 : vector<8x128xf32>
    %cst_34 = arith.constant 0.000000e+00 : f32
    %49 = vector.broadcast %cst_34 : f32 to vector<8x128xf32>
    %50 = arith.maximumf %46, %49 : vector<8x128xf32>
    %cst_35 = arith.constant 2.000000e-01 : f32
    %51 = vector.broadcast %cst_35 : f32 to vector<8x128xf32>
    %52 = arith.mulf %51, %50 : vector<8x128xf32>
    %53 = arith.addf %48, %52 : vector<8x128xf32>
    %c3 = arith.constant 3 : index
    %c0_36 = arith.constant 0 : index
    %c0_37 = arith.constant 0 : index
    %54 = vector.load %arg5[%c3, %c0_36, %c0_37] : memref<8x8x128xf32, #tpu.memory_space<vmem>>, vector<1x8x128xf32>
    %55 = vector.shape_cast %54 : vector<1x8x128xf32> to vector<8x128xf32>
    %56 = vector.shape_cast %53 : vector<8x128xf32> to vector<1x8x128xf32>
    tpu.vector_store %arg5[%c3, %c0_36, %c0_37], %56 {strides = array<i32>} : memref<8x8x128xf32, #tpu.memory_space<vmem>>, vector<1x8x128xf32>,
    %c3_38 = arith.constant 3 : index
    %c0_39 = arith.constant 0 : index
    %c0_40 = arith.constant 0 : index
    %57 = vector.load %arg4[%c3_38, %c0_39, %c0_40] : memref<8x8x40xf32, #tpu.memory_space<vmem>>, vector<1x8x40xf32>
    %58 = vector.shape_cast %57 : vector<1x8x40xf32> to vector<8x40xf32>
    %cst_41 = arith.constant dense<0.000000e+00> : vector<8x128xf32>
    %59 = tpu.matmul %58, %4, %cst_41 {dimension_numbers = #tpu.dot_dimension_numbers<[1], [0], [0], [1], [0, 0, 1, 1], [], []>} : vector<8x40xf32>, vector<40x128xf32>, vector<8x128xf32> -> vector<8x128xf32>
    %60 = arith.truncf %53 : vector<8x128xf32> to vector<8x128xbf16>
    %cst_42 = arith.constant dense<0.000000e+00> : vector<8x128xf32>
    %61 = tpu.matmul %60, %3, %cst_42 {dimension_numbers = #tpu.dot_dimension_numbers<[1], [0], [0], [1], [0, 0, 1, 1], [], []>} : vector<8x128xbf16>, vector<128x128xbf16>, vector<8x128xf32> -> vector<8x128xf32>
    %62 = arith.addf %61, %59 : vector<8x128xf32>
    %cst_43 = arith.constant 8.000000e-01 : f32
    %63 = vector.broadcast %cst_43 : f32 to vector<8x128xf32>
    %64 = arith.mulf %63, %53 : vector<8x128xf32>
    %cst_44 = arith.constant 0.000000e+00 : f32
    %65 = vector.broadcast %cst_44 : f32 to vector<8x128xf32>
    %66 = arith.maximumf %62, %65 : vector<8x128xf32>
    %cst_45 = arith.constant 2.000000e-01 : f32
    %67 = vector.broadcast %cst_45 : f32 to vector<8x128xf32>
    %68 = arith.mulf %67, %66 : vector<8x128xf32>
    %69 = arith.addf %64, %68 : vector<8x128xf32>
    %c4 = arith.constant 4 : index
    %c0_46 = arith.constant 0 : index
    %c0_47 = arith.constant 0 : index
    %70 = vector.load %arg5[%c4, %c0_46, %c0_47] : memref<8x8x128xf32, #tpu.memory_space<vmem>>, vector<1x8x128xf32>
    %71 = vector.shape_cast %70 : vector<1x8x128xf32> to vector<8x128xf32>
    %72 = vector.shape_cast %69 : vector<8x128xf32> to vector<1x8x128xf32>
    tpu.vector_store %arg5[%c4, %c0_46, %c0_47], %72 {strides = array<i32>} : memref<8x8x128xf32, #tpu.memory_space<vmem>>, vector<1x8x128xf32>,
    %c4_48 = arith.constant 4 : index
    %c0_49 = arith.constant 0 : index
    %c0_50 = arith.constant 0 : index
    %73 = vector.load %arg4[%c4_48, %c0_49, %c0_50] : memref<8x8x40xf32, #tpu.memory_space<vmem>>, vector<1x8x40xf32>
    %74 = vector.shape_cast %73 : vector<1x8x40xf32> to vector<8x40xf32>
    %cst_51 = arith.constant dense<0.000000e+00> : vector<8x128xf32>
    %75 = tpu.matmul %74, %4, %cst_51 {dimension_numbers = #tpu.dot_dimension_numbers<[1], [0], [0], [1], [0, 0, 1, 1], [], []>} : vector<8x40xf32>, vector<40x128xf32>, vector<8x128xf32> -> vector<8x128xf32>
    %76 = arith.truncf %69 : vector<8x128xf32> to vector<8x128xbf16>
    %cst_52 = arith.constant dense<0.000000e+00> : vector<8x128xf32>
    %77 = tpu.matmul %76, %3, %cst_52 {dimension_numbers = #tpu.dot_dimension_numbers<[1], [0], [0], [1], [0, 0, 1, 1], [], []>} : vector<8x128xbf16>, vector<128x128xbf16>, vector<8x128xf32> -> vector<8x128xf32>
    %78 = arith.addf %77, %75 : vector<8x128xf32>
    %cst_53 = arith.constant 8.000000e-01 : f32
    %79 = vector.broadcast %cst_53 : f32 to vector<8x128xf32>
    %80 = arith.mulf %79, %69 : vector<8x128xf32>
    %cst_54 = arith.constant 0.000000e+00 : f32
    %81 = vector.broadcast %cst_54 : f32 to vector<8x128xf32>
    %82 = arith.maximumf %78, %81 : vector<8x128xf32>
    %cst_55 = arith.constant 2.000000e-01 : f32
    %83 = vector.broadcast %cst_55 : f32 to vector<8x128xf32>
    %84 = arith.mulf %83, %82 : vector<8x128xf32>
    %85 = arith.addf %80, %84 : vector<8x128xf32>
    %c5 = arith.constant 5 : index
    %c0_56 = arith.constant 0 : index
    %c0_57 = arith.constant 0 : index
    %86 = vector.load %arg5[%c5, %c0_56, %c0_57] : memref<8x8x128xf32, #tpu.memory_space<vmem>>, vector<1x8x128xf32>
    %87 = vector.shape_cast %86 : vector<1x8x128xf32> to vector<8x128xf32>
    %88 = vector.shape_cast %85 : vector<8x128xf32> to vector<1x8x128xf32>
    tpu.vector_store %arg5[%c5, %c0_56, %c0_57], %88 {strides = array<i32>} : memref<8x8x128xf32, #tpu.memory_space<vmem>>, vector<1x8x128xf32>,
    %c5_58 = arith.constant 5 : index
    %c0_59 = arith.constant 0 : index
    %c0_60 = arith.constant 0 : index
    %89 = vector.load %arg4[%c5_58, %c0_59, %c0_60] : memref<8x8x40xf32, #tpu.memory_space<vmem>>, vector<1x8x40xf32>
    %90 = vector.shape_cast %89 : vector<1x8x40xf32> to vector<8x40xf32>
    %cst_61 = arith.constant dense<0.000000e+00> : vector<8x128xf32>
    %91 = tpu.matmul %90, %4, %cst_61 {dimension_numbers = #tpu.dot_dimension_numbers<[1], [0], [0], [1], [0, 0, 1, 1], [], []>} : vector<8x40xf32>, vector<40x128xf32>, vector<8x128xf32> -> vector<8x128xf32>
    %92 = arith.truncf %85 : vector<8x128xf32> to vector<8x128xbf16>
    %cst_62 = arith.constant dense<0.000000e+00> : vector<8x128xf32>
    %93 = tpu.matmul %92, %3, %cst_62 {dimension_numbers = #tpu.dot_dimension_numbers<[1], [0], [0], [1], [0, 0, 1, 1], [], []>} : vector<8x128xbf16>, vector<128x128xbf16>, vector<8x128xf32> -> vector<8x128xf32>
    %94 = arith.addf %93, %91 : vector<8x128xf32>
    %cst_63 = arith.constant 8.000000e-01 : f32
    %95 = vector.broadcast %cst_63 : f32 to vector<8x128xf32>
    %96 = arith.mulf %95, %85 : vector<8x128xf32>
    %cst_64 = arith.constant 0.000000e+00 : f32
    %97 = vector.broadcast %cst_64 : f32 to vector<8x128xf32>
    %98 = arith.maximumf %94, %97 : vector<8x128xf32>
    %cst_65 = arith.constant 2.000000e-01 : f32
    %99 = vector.broadcast %cst_65 : f32 to vector<8x128xf32>
    %100 = arith.mulf %99, %98 : vector<8x128xf32>
    %101 = arith.addf %96, %100 : vector<8x128xf32>
    %c6 = arith.constant 6 : index
    %c0_66 = arith.constant 0 : index
    %c0_67 = arith.constant 0 : index
    %102 = vector.load %arg5[%c6, %c0_66, %c0_67] : memref<8x8x128xf32, #tpu.memory_space<vmem>>, vector<1x8x128xf32>
    %103 = vector.shape_cast %102 : vector<1x8x128xf32> to vector<8x128xf32>
    %104 = vector.shape_cast %101 : vector<8x128xf32> to vector<1x8x128xf32>
    tpu.vector_store %arg5[%c6, %c0_66, %c0_67], %104 {strides = array<i32>} : memref<8x8x128xf32, #tpu.memory_space<vmem>>, vector<1x8x128xf32>,
    %c6_68 = arith.constant 6 : index
    %c0_69 = arith.constant 0 : index
    %c0_70 = arith.constant 0 : index
    %105 = vector.load %arg4[%c6_68, %c0_69, %c0_70] : memref<8x8x40xf32, #tpu.memory_space<vmem>>, vector<1x8x40xf32>
    %106 = vector.shape_cast %105 : vector<1x8x40xf32> to vector<8x40xf32>
    %cst_71 = arith.constant dense<0.000000e+00> : vector<8x128xf32>
    %107 = tpu.matmul %106, %4, %cst_71 {dimension_numbers = #tpu.dot_dimension_numbers<[1], [0], [0], [1], [0, 0, 1, 1], [], []>} : vector<8x40xf32>, vector<40x128xf32>, vector<8x128xf32> -> vector<8x128xf32>
    %108 = arith.truncf %101 : vector<8x128xf32> to vector<8x128xbf16>
    %cst_72 = arith.constant dense<0.000000e+00> : vector<8x128xf32>
    %109 = tpu.matmul %108, %3, %cst_72 {dimension_numbers = #tpu.dot_dimension_numbers<[1], [0], [0], [1], [0, 0, 1, 1], [], []>} : vector<8x128xbf16>, vector<128x128xbf16>, vector<8x128xf32> -> vector<8x128xf32>
    %110 = arith.addf %109, %107 : vector<8x128xf32>
    %cst_73 = arith.constant 8.000000e-01 : f32
    %111 = vector.broadcast %cst_73 : f32 to vector<8x128xf32>
    %112 = arith.mulf %111, %101 : vector<8x128xf32>
    %cst_74 = arith.constant 0.000000e+00 : f32
    %113 = vector.broadcast %cst_74 : f32 to vector<8x128xf32>
    %114 = arith.maximumf %110, %113 : vector<8x128xf32>
    %cst_75 = arith.constant 2.000000e-01 : f32
    %115 = vector.broadcast %cst_75 : f32 to vector<8x128xf32>
    %116 = arith.mulf %115, %114 : vector<8x128xf32>
    %117 = arith.addf %112, %116 : vector<8x128xf32>
    %c7 = arith.constant 7 : index
    %c0_76 = arith.constant 0 : index
    %c0_77 = arith.constant 0 : index
    %118 = vector.load %arg5[%c7, %c0_76, %c0_77] : memref<8x8x128xf32, #tpu.memory_space<vmem>>, vector<1x8x128xf32>
    %119 = vector.shape_cast %118 : vector<1x8x128xf32> to vector<8x128xf32>
    %120 = vector.shape_cast %117 : vector<8x128xf32> to vector<1x8x128xf32>
    tpu.vector_store %arg5[%c7, %c0_76, %c0_77], %120 {strides = array<i32>} : memref<8x8x128xf32, #tpu.memory_space<vmem>>, vector<1x8x128xf32>,
    %c7_78 = arith.constant 7 : index
    %c0_79 = arith.constant 0 : index
    %c0_80 = arith.constant 0 : index
    %121 = vector.load %arg4[%c7_78, %c0_79, %c0_80] : memref<8x8x40xf32, #tpu.memory_space<vmem>>, vector<1x8x40xf32>
    %122 = vector.shape_cast %121 : vector<1x8x40xf32> to vector<8x40xf32>
    %cst_81 = arith.constant dense<0.000000e+00> : vector<8x128xf32>
    %123 = tpu.matmul %122, %4, %cst_81 {dimension_numbers = #tpu.dot_dimension_numbers<[1], [0], [0], [1], [0, 0, 1, 1], [], []>} : vector<8x40xf32>, vector<40x128xf32>, vector<8x128xf32> -> vector<8x128xf32>
    %124 = arith.truncf %117 : vector<8x128xf32> to vector<8x128xbf16>
    %cst_82 = arith.constant dense<0.000000e+00> : vector<8x128xf32>
    %125 = tpu.matmul %124, %3, %cst_82 {dimension_numbers = #tpu.dot_dimension_numbers<[1], [0], [0], [1], [0, 0, 1, 1], [], []>} : vector<8x128xbf16>, vector<128x128xbf16>, vector<8x128xf32> -> vector<8x128xf32>
    %126 = arith.addf %125, %123 : vector<8x128xf32>
    %cst_83 = arith.constant 8.000000e-01 : f32
    %127 = vector.broadcast %cst_83 : f32 to vector<8x128xf32>
    %128 = arith.mulf %127, %117 : vector<8x128xf32>
    %cst_84 = arith.constant 0.000000e+00 : f32
    %129 = vector.broadcast %cst_84 : f32 to vector<8x128xf32>
    %130 = arith.maximumf %126, %129 : vector<8x128xf32>
    %cst_85 = arith.constant 2.000000e-01 : f32
    %131 = vector.broadcast %cst_85 : f32 to vector<8x128xf32>
    %132 = arith.mulf %131, %130 : vector<8x128xf32>
    %133 = arith.addf %128, %132 : vector<8x128xf32>
    %c0_86 = arith.constant 0 : index
    %c0_87 = arith.constant 0 : index
    %134 = vector.load %arg6[%c0_86, %c0_87] : memref<8x128xf32, #tpu.memory_space<vmem>>, vector<8x128xf32>
    tpu.vector_store %arg6[%c0_86, %c0_87], %133 {strides = array<i32>} : memref<8x128xf32, #tpu.memory_space<vmem>>, vector<8x128xf32>,
    return
  }
  func.func @transform_0(%arg0: i32, %arg1: i32) -> (i32, i32) {
    %c0_i32 = arith.constant 0 : i32
    %c0_i32_0 = arith.constant 0 : i32
    %c0_i32_1 = arith.constant 0 : i32
    return %c0_i32, %c0_i32_0 : i32, i32
  }
  func.func @transform_1(%arg0: i32, %arg1: i32) -> (i32, i32) {
    %c0_i32 = arith.constant 0 : i32
    %c0_i32_0 = arith.constant 0 : i32
    %c0_i32_1 = arith.constant 0 : i32
    return %c0_i32, %c0_i32_0 : i32, i32
  }
  func.func @transform_2(%arg0: i32, %arg1: i32) -> (i32, i32, i32) {
    %c0_i32 = arith.constant 0 : i32
    %c0_i32_0 = arith.constant 0 : i32
    return %arg1, %arg0, %c0_i32 : i32, i32, i32
  }
  func.func @transform_3(%arg0: i32, %arg1: i32) -> (i32, i32, i32) {
    %c0_i32 = arith.constant 0 : i32
    %c0_i32_0 = arith.constant 0 : i32
    return %arg1, %arg0, %c0_i32 : i32, i32, i32
  }
}

</mosaic_0001>

<llo_original>
// kernel: net2_forward.1
$region0: #{net2_forward.1}
  #allocation0 [shape = 'u32[]', space=smem, size = 0x4, offset = 0x4, fixed_abs, tag = 'smem constant byte address 0x4 - core index']
  #allocation1 [shape = 'u32[144,128]{1,0:T(1,128)}', space=vmem, size = 0x12000, scoped, tag = 'internal scratch']
  #allocation2 [shape = 'f32[8,128]{1,0:T(8,128)}', space=vmem, size = 0x1000, scoped, tag = 'scratch operand']
  %s0 = inlined_call_operand.vmem [shape: bf16[128,128], index: 0, kind: input, shape index: {}]
  %s1 = inlined_call_operand.vmem [shape: f32[40,128], index: 1, kind: input, shape index: {}]
  %s2 = inlined_call_operand.vmem [shape: f32[8,8,40], index: 2, kind: input, shape index: {}]
  %s3 = inlined_call_operand.vmem [shape: f32[8,8,128], index: 3, kind: output, shape index: {}]
  %s4 = sld [smem:[#allocation0]]
  $region26: #{net2_forward.1} parent=0
    _
  %s6 = ssub.s32 1, %s4
  %s7 = scalar_select 0, %s6, %s4
  // Predicated region
  $region2: #{net2_forward.1} parent=0 // pred_check
    _
  $region3: #{net2_forward.1} parent=0 // pred_check_branch
    %9 = sbr.rel (0) target = $region5
  $region4: #{net2_forward.1} parent=0 // pred_region
    _
  $region5: #{net2_forward.1} parent=0 // pred_fallthru
    _
  // Predicated region
  $region6: #{net2_forward.1} parent=0 // pred_check
    _
  $region7: #{net2_forward.1} parent=0 // pred_check_branch
    %11 = sbr.rel (0) target = $region9
  $region8: #{net2_forward.1} parent=0 // pred_region
    _
  $region9: #{net2_forward.1} parent=0 // pred_fallthru
    _
  // Predicated region
  $region10: #{net2_forward.1} parent=0 // pred_check
    _
  $region11: #{net2_forward.1} parent=0 // pred_check_branch
    %13 = sbr.rel (0) target = $region13
  $region12: #{net2_forward.1} parent=0 // pred_region
    _
  $region13: #{net2_forward.1} parent=0 // pred_fallthru
    _
  %p15 = scmp.eq.s32.totalorder 0, 0
  // Predicated region
  $region14: #{net2_forward.1} parent=0 // pred_check
    %p16 = pneg %p15
  $region15: #{net2_forward.1} parent=0 // pred_check_branch
    %18 = sbr.rel (%p16) target = $region17
  $region16: #{net2_forward.1} parent=0 // pred_region
    %19 = vst [vmem:[#allocation2] sm:$0xff] 0.0
  $region17: #{net2_forward.1} parent=0 // pred_fallthru
    _
  %v20 = vld [vmem:[%s0] sm:$0xf]
  %v21 = vld [vmem:[%s0 + $0x4] sm:$0xf]
  %v22 = vld [vmem:[%s0 + $0x8] sm:$0xf]
  %v23 = vld [vmem:[%s0 + $0xc] sm:$0xf]
  %v24 = vld [vmem:[%s0 + $0x10] sm:$0xf]
  %v25 = vld [vmem:[%s0 + $0x14] sm:$0xf]
  %v26 = vld [vmem:[%s0 + $0x18] sm:$0xf]
  %v27 = vld [vmem:[%s0 + $0x1c] sm:$0xf]
  %v28 = vld [vmem:[%s0 + $0x20] sm:$0xf]
  %v29 = vld [vmem:[%s0 + $0x24] sm:$0xf]
  %v30 = vld [vmem:[%s0 + $0x28] sm:$0xf]
  %v31 = vld [vmem:[%s0 + $0x2c] sm:$0xf]
  %v32 = vld [vmem:[%s0 + $0x30] sm:$0xf]
  %v33 = vld [vmem:[%s0 + $0x34] sm:$0xf]
  %v34 = vld [vmem:[%s0 + $0x38] sm:$0xf]
  %v35 = vld [vmem:[%s0 + $0x3c] sm:$0xf]
  %v36 = vld [vmem:[%s1] sm:$0xff]
  %v37 = vld [vmem:[%s1 + $0x8] sm:$0xff]
  %v38 = vld [vmem:[%s1 + $0x10] sm:$0xff]
  %v39 = vld [vmem:[%s1 + $0x18] sm:$0xff]
  %v40 = vld [vmem:[%s1 + $0x20] sm:$0xff]
  %v41 = vld [vmem:[#allocation2] sm:$0xff]
  %42 = vst [vmem:[%s3] sm:$0xff] %v41
  %v43 = vld [vmem:[%s2] sm:$0xff]
  %vm44 = vcmask 326656
  %v46 = vsel %vm44, %v43, 0
  %48 = vmatprep.subr.mxu0 0.0
  %49 = vmatpush1.msra.mxu0 0.0
  %50 = vmatprep.subr.mxu0 0.0
  %51 = vmatpush1.msra.mxu0 0.0
  %52 = vmatprep.subr.mxu0 0.0
  %53 = vmatpush1.msra.mxu0 0.0
  %54 = vmatprep.subr.mxu0 0.0
  %55 = vmatpush1.msra.mxu0 0.0
  %56 = vmatprep.subr.mxu0 0.0
  %57 = vmatpush1.msra.mxu0 0.0
  %58 = vmatprep.subr.mxu0 0.0
  %59 = vmatpush1.msra.mxu0 0.0
  %60 = vmatprep.subr.mxu0 0.0
  %61 = vmatpush1.msra.mxu0 0.0
  %62 = vmatprep.subr.mxu0 0.0
  %63 = vmatpush1.msra.mxu0 0.0
  %64 = vmatprep.subr.mxu0 0.0
  %65 = vmatpush1.msra.mxu0 0.0
  %66 = vmatprep.subr.mxu0 0.0
  %67 = vmatpush1.msra.mxu0 0.0
  %68 = vmatprep.subr.mxu0 0.0
  %69 = vmatpush1.msra.mxu0 0.0
  %70 = vmatprep.subr.mxu0 0.0
  %71 = vmatpush1.msra.mxu0 %v40
  %72 = vmatprep.subr.mxu0 0.0
  %73 = vmatpush1.msra.mxu0 %v39
  %74 = vmatprep.subr.mxu0 0.0
  %75 = vmatpush1.msra.mxu0 %v38
  %76 = vmatprep.subr.mxu0 0.0
  %77 = vmatpush1.msra.mxu0 %v37
  %78 = vmatprep.subr.mxu0 0.0
  %79 = vmatpush1.msra.mxu0 %v36
  %80 = vmatprep.subr.mxu0 0.0
  %81 = vmatpush2.msra.mxu0 0.0
  %82 = vmatprep.subr.mxu0 0.0
  %83 = vmatpush2.msra.mxu0 0.0
  %84 = vmatprep.subr.mxu0 0.0
  %85 = vmatpush2.msra.mxu0 0.0
  %86 = vmatprep.subr.mxu0 0.0
  %87 = vmatpush2.msra.mxu0 0.0
  %88 = vmatprep.subr.mxu0 0.0
  %89 = vmatpush2.msra.mxu0 0.0
  %90 = vmatprep.subr.mxu0 0.0
  %91 = vmatpush2.msra.mxu0 0.0
  %92 = vmatprep.subr.mxu0 0.0
  %93 = vmatpush2.msra.mxu0 0.0
  %94 = vmatprep.subr.mxu0 0.0
  %95 = vmatpush2.msra.mxu0 0.0
  %96 = vmatprep.subr.mxu0 0.0
  %97 = vmatpush2.msra.mxu0 0.0
  %98 = vmatprep.subr.mxu0 0.0
  %99 = vmatpush2.msra.mxu0 0.0
  %100 = vmatprep.subr.mxu0 0.0
  %101 = vmatpush2.msra.mxu0 0.0
  %102 = vmatprep.subr.mxu0 0.0
  %103 = vmatpush2.msra.mxu0 0.0
  %104 = vmatprep.subr.mxu0 0.0
  %105 = vmatpush2.msra.mxu0 0.0
  %106 = vmatprep.subr.mxu0 0.0
  %107 = vmatpush2.msra.mxu0 0.0
  %108 = vmatprep.subr.mxu0 0.0
  %109 = vmatpush2.msra.mxu0 0.0
  %110 = vmatprep.subr.mxu0 0.0
  %111 = vmatpush2.msra.mxu0 0.0
  %112 = vmatprep.mubr.f32.mxu0 0.0
  %113 = vmatmul.mubr.f32.gmra.mxu0 %v46
  %v114 = vpop.f32.mrf.mxu0
  %v115 = vadd.f32 0.0, %v114
  %v116 = vpop.f32.mrf.mxu0
  %117 = vdwg.mxu0
  %v118 = vpack.c.bf16 %v41, %v41
  %v135 = vunpack.c.l.b16 %v20
  %v136 = vunpack.c.l.b16 %v21
  %v137 = vunpack.c.l.b16 %v22
  %v138 = vunpack.c.l.b16 %v23
  %v139 = vunpack.c.l.b16 %v24
  %v140 = vunpack.c.l.b16 %v25
  %v141 = vunpack.c.l.b16 %v26
  %v142 = vunpack.c.l.b16 %v27
  %v143 = vunpack.c.l.b16 %v28
  %v144 = vunpack.c.l.b16 %v29
  %v145 = vunpack.c.l.b16 %v30
  %v146 = vunpack.c.l.b16 %v31
  %v147 = vunpack.c.l.b16 %v32
  %v148 = vunpack.c.l.b16 %v33
  %v149 = vunpack.c.l.b16 %v34
  %v150 = vunpack.c.l.b16 %v35
  %v151 = vpack.c.b16 %v136, %v135
  %v152 = vpack.c.b16 %v138, %v137
  %v153 = vpack.c.b16 %v140, %v139
  %v154 = vpack.c.b16 %v142, %v141
  %v155 = vpack.c.b16 %v144, %v143
  %v156 = vpack.c.b16 %v146, %v145
  %v157 = vpack.c.b16 %v148, %v147
  %v158 = vpack.c.b16 %v150, %v149
  %167 = vmatprep.subr.bf16.mxu0 0
  %168 = vmatpush1.bf16.msra.mxu0 %v158
  %169 = vmatprep.subr.bf16.mxu0 0
  %170 = vmatpush1.bf16.msra.mxu0 %v157
  %171 = vmatprep.subr.bf16.mxu0 0
  %172 = vmatpush1.bf16.msra.mxu0 %v156
  %173 = vmatprep.subr.bf16.mxu0 0
  %174 = vmatpush1.bf16.msra.mxu0 %v155
  %175 = vmatprep.subr.bf16.mxu0 0
  %176 = vmatpush1.bf16.msra.mxu0 %v154
  %177 = vmatprep.subr.bf16.mxu0 0
  %178 = vmatpush1.bf16.msra.mxu0 %v153
  %179 = vmatprep.subr.bf16.mxu0 0
  %180 = vmatpush1.bf16.msra.mxu0 %v152
  %181 = vmatprep.subr.bf16.mxu0 0
  %182 = vmatpush1.bf16.msra.mxu0 %v151
  %183 = vmatprep.subr.bf16.mxu0 0
  %184 = vmatpush2.bf16.msra.mxu0 0
  %185 = vmatprep.subr.bf16.mxu0 0
  %186 = vmatpush2.bf16.msra.mxu0 0
  %187 = vmatprep.subr.bf16.mxu0 0
  %188 = vmatpush2.bf16.msra.mxu0 0
  %189 = vmatprep.subr.bf16.mxu0 0
  %190 = vmatpush2.bf16.msra.mxu0 0
  %191 = vmatprep.subr.bf16.mxu0 0
  %192 = vmatpush2.bf16.msra.mxu0 0
  %193 = vmatprep.subr.bf16.mxu0 0
  %194 = vmatpush2.bf16.msra.mxu0 0
  %195 = vmatprep.subr.bf16.mxu0 0
  %196 = vmatpush2.bf16.msra.mxu0 0
  %197 = vmatprep.subr.bf16.mxu0 0
  %198 = vmatpush2.bf16.msra.mxu0 0
  %199 = vmatprep.mubr.bf16.mxu0 0
  %200 = vmatmul.mubr.bf16.gmra.mxu0 %v118
  %v201 = vpop.f32.mrf.mxu0
  %v202 = vadd.f32 %v115, %v201
  %v203 = vpop.f32.mrf.mxu0
  %v204 = vpop.f32.mrf.mxu0
  %v205 = vpop.f32.mrf.mxu0
  %206 = vdwg.mxu0
  %v207 = vmul.f32 %v41, 0.8
  %v208 = vmax.f32 %v202, 0.0
  %v209 = vmul.f32 %v208, 0.2
  %v210 = vadd.f32 %v207, %v209
  %s211 = scalar_lea.vmem %s3, 8
  %212 = vst [vmem:[%s211] sm:$0xff] %v210
  %s213 = scalar_lea.vmem %s2, 8
  %v214 = vld [vmem:[%s213] sm:$0xff]
  %v216 = vsel %vm44, %v214, 0
  %218 = vmatprep.subr.mxu0 0.0
  %219 = vmatpush1.msra.mxu0 0.0
  %220 = vmatprep.subr.mxu0 0.0
  %221 = vmatpush1.msra.mxu0 0.0
  %222 = vmatprep.subr.mxu0 0.0
  %223 = vmatpush1.msra.mxu0 0.0
  %224 = vmatprep.subr.mxu0 0.0
  %225 = vmatpush1.msra.mxu0 0.0
  %226 = vmatprep.subr.mxu0 0.0
  %227 = vmatpush1.msra.mxu0 0.0
  %228 = vmatprep.subr.mxu0 0.0
  %229 = vmatpush1.msra.mxu0 0.0
  %230 = vmatprep.subr.mxu0 0.0
  %231 = vmatpush1.msra.mxu0 0.0
  %232 = vmatprep.subr.mxu0 0.0
  %233 = vmatpush1.msra.mxu0 0.0
  %234 = vmatprep.subr.mxu0 0.0
  %235 = vmatpush1.msra.mxu0 0.0
  %236 = vmatprep.subr.mxu0 0.0
  %237 = vmatpush1.msra.mxu0 0.0
  %238 = vmatprep.subr.mxu0 0.0
  %239 = vmatpush1.msra.mxu0 0.0
  %240 = vmatprep.subr.mxu0 0.0
  %241 = vmatpush1.msra.mxu0 %v40
  %242 = vmatprep.subr.mxu0 0.0
  %243 = vmatpush1.msra.mxu0 %v39
  %244 = vmatprep.subr.mxu0 0.0
  %245 = vmatpush1.msra.mxu0 %v38
  %246 = vmatprep.subr.mxu0 0.0
  %247 = vmatpush1.msra.mxu0 %v37
  %248 = vmatprep.subr.mxu0 0.0
  %249 = vmatpush1.msra.mxu0 %v36
  %250 = vmatprep.subr.mxu0 0.0
  %251 = vmatpush2.msra.mxu0 0.0
  %252 = vmatprep.subr.mxu0 0.0
  %253 = vmatpush2.msra.mxu0 0.0
  %254 = vmatprep.subr.mxu0 0.0
  %255 = vmatpush2.msra.mxu0 0.0
  %256 = vmatprep.subr.mxu0 0.0
  %257 = vmatpush2.msra.mxu0 0.0
  %258 = vmatprep.subr.mxu0 0.0
  %259 = vmatpush2.msra.mxu0 0.0
  %260 = vmatprep.subr.mxu0 0.0
  %261 = vmatpush2.msra.mxu0 0.0
  %262 = vmatprep.subr.mxu0 0.0
  %263 = vmatpush2.msra.mxu0 0.0
  %264 = vmatprep.subr.mxu0 0.0
  %265 = vmatpush2.msra.mxu0 0.0
  %266 = vmatprep.subr.mxu0 0.0
  %267 = vmatpush2.msra.mxu0 0.0
  %268 = vmatprep.subr.mxu0 0.0
  %269 = vmatpush2.msra.mxu0 0.0
  %270 = vmatprep.subr.mxu0 0.0
  %271 = vmatpush2.msra.mxu0 0.0
  %272 = vmatprep.subr.mxu0 0.0
  %273 = vmatpush2.msra.mxu0 0.0
  %274 = vmatprep.subr.mxu0 0.0
  %275 = vmatpush2.msra.mxu0 0.0
  %276 = vmatprep.subr.mxu0 0.0
  %277 = vmatpush2.msra.mxu0 0.0
  %278 = vmatprep.subr.mxu0 0.0
  %279 = vmatpush2.msra.mxu0 0.0
  %280 = vmatprep.subr.mxu0 0.0
  %281 = vmatpush2.msra.mxu0 0.0
  %282 = vmatprep.mubr.f32.mxu0 0.0
  %283 = vmatmul.mubr.f32.gmra.mxu0 %v216
  %v284 = vpop.f32.mrf.mxu0
  %v285 = vadd.f32 0.0, %v284
  %v286 = vpop.f32.mrf.mxu0
  %287 = vdwg.mxu0
  %v288 = vpack.c.bf16 %v210, %v210
  %289 = vmatprep.subr.bf16.mxu0 0
  %290 = vmatpush1.bf16.msra.mxu0 %v158
  %291 = vmatprep.subr.bf16.mxu0 0
  %292 = vmatpush1.bf16.msra.mxu0 %v157
  %293 = vmatprep.subr.bf16.mxu0 0
  %294 = vmatpush1.bf16.msra.mxu0 %v156
  %295 = vmatprep.subr.bf16.mxu0 0
  %296 = vmatpush1.bf16.msra.mxu0 %v155
  %297 = vmatprep.subr.bf16.mxu0 0
  %298 = vmatpush1.bf16.msra.mxu0 %v154
  %299 = vmatprep.subr.bf16.mxu0 0
  %300 = vmatpush1.bf16.msra.mxu0 %v153
  %301 = vmatprep.subr.bf16.mxu0 0
  %302 = vmatpush1.bf16.msra.mxu0 %v152
  %303 = vmatprep.subr.bf16.mxu0 0
  %304 = vmatpush1.bf16.msra.mxu0 %v151
  %305 = vmatprep.subr.bf16.mxu0 0
  %306 = vmatpush2.bf16.msra.mxu0 0
  %307 = vmatprep.subr.bf16.mxu0 0
  %308 = vmatpush2.bf16.msra.mxu0 0
  %309 = vmatprep.subr.bf16.mxu0 0
  %310 = vmatpush2.bf16.msra.mxu0 0
  %311 = vmatprep.subr.bf16.mxu0 0
  %312 = vmatpush2.bf16.msra.mxu0 0
  %313 = vmatprep.subr.bf16.mxu0 0
  %314 = vmatpush2.bf16.msra.mxu0 0
  %315 = vmatprep.subr.bf16.mxu0 0
  %316 = vmatpush2.bf16.msra.mxu0 0
  %317 = vmatprep.subr.bf16.mxu0 0
  %318 = vmatpush2.bf16.msra.mxu0 0
  %319 = vmatprep.subr.bf16.mxu0 0
  %320 = vmatpush2.bf16.msra.mxu0 0
  %321 = vmatprep.mubr.bf16.mxu0 0
  %322 = vmatmul.mubr.bf16.gmra.mxu0 %v288
  %v323 = vpop.f32.mrf.mxu0
  %v324 = vadd.f32 %v285, %v323
  %v325 = vpop.f32.mrf.mxu0
  %v326 = vpop.f32.mrf.mxu0
  %v327 = vpop.f32.mrf.mxu0
  %328 = vdwg.mxu0
  %v329 = vmul.f32 %v210, 0.8
  %v330 = vmax.f32 %v324, 0.0
  %v331 = vmul.f32 %v330, 0.2
  %v332 = vadd.f32 %v329, %v331
  %s333 = scalar_lea.vmem %s3, 16
  %334 = vst [vmem:[%s333] sm:$0xff] %v332
  %s335 = scalar_lea.vmem %s2, 16
  %v336 = vld [vmem:[%s335] sm:$0xff]
  %v338 = vsel %vm44, %v336, 0
  %340 = vmatprep.subr.mxu0 0.0
  %341 = vmatpush1.msra.mxu0 0.0
  %342 = vmatprep.subr.mxu0 0.0
  %343 = vmatpush1.msra.mxu0 0.0
  %344 = vmatprep.subr.mxu0 0.0
  %345 = vmatpush1.msra.mxu0 0.0
  %346 = vmatprep.subr.mxu0 0.0
  %347 = vmatpush1.msra.mxu0 0.0
  %348 = vmatprep.subr.mxu0 0.0
  %349 = vmatpush1.msra.mxu0 0.0
  %350 = vmatprep.subr.mxu0 0.0
  %351 = vmatpush1.msra.mxu0 0.0
  %352 = vmatprep.subr.mxu0 0.0
  %353 = vmatpush1.msra.mxu0 0.0
  %354 = vmatprep.subr.mxu0 0.0
  %355 = vmatpush1.msra.mxu0 0.0
  %356 = vmatprep.subr.mxu0 0.0
  %357 = vmatpush1.msra.mxu0 0.0
  %358 = vmatprep.subr.mxu0 0.0
  %359 = vmatpush1.msra.mxu0 0.0
  %360 = vmatprep.subr.mxu0 0.0
  %361 = vmatpush1.msra.mxu0 0.0
  %362 = vmatprep.subr.mxu0 0.0
  %363 = vmatpush1.msra.mxu0 %v40
  %364 = vmatprep.subr.mxu0 0.0
  %365 = vmatpush1.msra.mxu0 %v39
  %366 = vmatprep.subr.mxu0 0.0
  %367 = vmatpush1.msra.mxu0 %v38
  %368 = vmatprep.subr.mxu0 0.0
  %369 = vmatpush1.msra.mxu0 %v37
  %370 = vmatprep.subr.mxu0 0.0
  %371 = vmatpush1.msra.mxu0 %v36
  %372 = vmatprep.subr.mxu0 0.0
  %373 = vmatpush2.msra.mxu0 0.0
  %374 = vmatprep.subr.mxu0 0.0
  %375 = vmatpush2.msra.mxu0 0.0
  %376 = vmatprep.subr.mxu0 0.0
  %377 = vmatpush2.msra.mxu0 0.0
  %378 = vmatprep.subr.mxu0 0.0
  %379 = vmatpush2.msra.mxu0 0.0
  %380 = vmatprep.subr.mxu0 0.0
  %381 = vmatpush2.msra.mxu0 0.0
  %382 = vmatprep.subr.mxu0 0.0
  %383 = vmatpush2.msra.mxu0 0.0
  %384 = vmatprep.subr.mxu0 0.0
  %385 = vmatpush2.msra.mxu0 0.0
  %386 = vmatprep.subr.mxu0 0.0
  %387 = vmatpush2.msra.mxu0 0.0
  %388 = vmatprep.subr.mxu0 0.0
  %389 = vmatpush2.msra.mxu0 0.0
  %390 = vmatprep.subr.mxu0 0.0
  %391 = vmatpush2.msra.mxu0 0.0
  %392 = vmatprep.subr.mxu0 0.0
  %393 = vmatpush2.msra.mxu0 0.0
  %394 = vmatprep.subr.mxu0 0.0
  %395 = vmatpush2.msra.mxu0 0.0
  %396 = vmatprep.subr.mxu0 0.0
  %397 = vmatpush2.msra.mxu0 0.0
  %398 = vmatprep.subr.mxu0 0.0
  %399 = vmatpush2.msra.mxu0 0.0
  %400 = vmatprep.subr.mxu0 0.0
  %401 = vmatpush2.msra.mxu0 0.0
  %402 = vmatprep.subr.mxu0 0.0
  %403 = vmatpush2.msra.mxu0 0.0
  %404 = vmatprep.mubr.f32.mxu0 0.0
  %405 = vmatmul.mubr.f32.gmra.mxu0 %v338
  %v406 = vpop.f32.mrf.mxu0
  %v407 = vadd.f32 0.0, %v406
  %v408 = vpop.f32.mrf.mxu0
  %409 = vdwg.mxu0
  %v410 = vpack.c.bf16 %v332, %v332
  %411 = vmatprep.subr.bf16.mxu0 0
  %412 = vmatpush1.bf16.msra.mxu0 %v158
  %413 = vmatprep.subr.bf16.mxu0 0
  %414 = vmatpush1.bf16.msra.mxu0 %v157
  %415 = vmatprep.subr.bf16.mxu0 0
  %416 = vmatpush1.bf16.msra.mxu0 %v156
  %417 = vmatprep.subr.bf16.mxu0 0
  %418 = vmatpush1.bf16.msra.mxu0 %v155
  %419 = vmatprep.subr.bf16.mxu0 0
  %420 = vmatpush1.bf16.msra.mxu0 %v154
  %421 = vmatprep.subr.bf16.mxu0 0
  %422 = vmatpush1.bf16.msra.mxu0 %v153
  %423 = vmatprep.subr.bf16.mxu0 0
  %424 = vmatpush1.bf16.msra.mxu0 %v152
  %425 = vmatprep.subr.bf16.mxu0 0
  %426 = vmatpush1.bf16.msra.mxu0 %v151
  %427 = vmatprep.subr.bf16.mxu0 0
  %428 = vmatpush2.bf16.msra.mxu0 0
  %429 = vmatprep.subr.bf16.mxu0 0
  %430 = vmatpush2.bf16.msra.mxu0 0
  %431 = vmatprep.subr.bf16.mxu0 0
  %432 = vmatpush2.bf16.msra.mxu0 0
  %433 = vmatprep.subr.bf16.mxu0 0
  %434 = vmatpush2.bf16.msra.mxu0 0
  %435 = vmatprep.subr.bf16.mxu0 0
  %436 = vmatpush2.bf16.msra.mxu0 0
  %437 = vmatprep.subr.bf16.mxu0 0
  %438 = vmatpush2.bf16.msra.mxu0 0
  %439 = vmatprep.subr.bf16.mxu0 0
  %440 = vmatpush2.bf16.msra.mxu0 0
  %441 = vmatprep.subr.bf16.mxu0 0
  %442 = vmatpush2.bf16.msra.mxu0 0
  %443 = vmatprep.mubr.bf16.mxu0 0
  %444 = vmatmul.mubr.bf16.gmra.mxu0 %v410
  %v445 = vpop.f32.mrf.mxu0
  %v446 = vadd.f32 %v407, %v445
  %v447 = vpop.f32.mrf.mxu0
  %v448 = vpop.f32.mrf.mxu0
  %v449 = vpop.f32.mrf.mxu0
  %450 = vdwg.mxu0
  %v451 = vmul.f32 %v332, 0.8
  %v452 = vmax.f32 %v446, 0.0
  %v453 = vmul.f32 %v452, 0.2
  %v454 = vadd.f32 %v451, %v453
  %s455 = scalar_lea.vmem %s3, 24
  %456 = vst [vmem:[%s455] sm:$0xff] %v454
  %s457 = scalar_lea.vmem %s2, 24
  %v458 = vld [vmem:[%s457] sm:$0xff]
  %v460 = vsel %vm44, %v458, 0
  %462 = vmatprep.subr.mxu0 0.0
  %463 = vmatpush1.msra.mxu0 0.0
  %464 = vmatprep.subr.mxu0 0.0
  %465 = vmatpush1.msra.mxu0 0.0
  %466 = vmatprep.subr.mxu0 0.0
  %467 = vmatpush1.msra.mxu0 0.0
  %468 = vmatprep.subr.mxu0 0.0
  %469 = vmatpush1.msra.mxu0 0.0
  %470 = vmatprep.subr.mxu0 0.0
  %471 = vmatpush1.msra.mxu0 0.0
  %472 = vmatprep.subr.mxu0 0.0
  %473 = vmatpush1.msra.mxu0 0.0
  %474 = vmatprep.subr.mxu0 0.0
  %475 = vmatpush1.msra.mxu0 0.0
  %476 = vmatprep.subr.mxu0 0.0
  %477 = vmatpush1.msra.mxu0 0.0
  %478 = vmatprep.subr.mxu0 0.0
  %479 = vmatpush1.msra.mxu0 0.0
  %480 = vmatprep.subr.mxu0 0.0
  %481 = vmatpush1.msra.mxu0 0.0
  %482 = vmatprep.subr.mxu0 0.0
  %483 = vmatpush1.msra.mxu0 0.0
  %484 = vmatprep.subr.mxu0 0.0
  %485 = vmatpush1.msra.mxu0 %v40
  %486 = vmatprep.subr.mxu0 0.0
  %487 = vmatpush1.msra.mxu0 %v39
  %488 = vmatprep.subr.mxu0 0.0
  %489 = vmatpush1.msra.mxu0 %v38
  %490 = vmatprep.subr.mxu0 0.0
  %491 = vmatpush1.msra.mxu0 %v37
  %492 = vmatprep.subr.mxu0 0.0
  %493 = vmatpush1.msra.mxu0 %v36
  %494 = vmatprep.subr.mxu0 0.0
  %495 = vmatpush2.msra.mxu0 0.0
  %496 = vmatprep.subr.mxu0 0.0
  %497 = vmatpush2.msra.mxu0 0.0
  %498 = vmatprep.subr.mxu0 0.0
  %499 = vmatpush2.msra.mxu0 0.0
  %500 = vmatprep.subr.mxu0 0.0
  %501 = vmatpush2.msra.mxu0 0.0
  %502 = vmatprep.subr.mxu0 0.0
  %503 = vmatpush2.msra.mxu0 0.0
  %504 = vmatprep.subr.mxu0 0.0
  %505 = vmatpush2.msra.mxu0 0.0
  %506 = vmatprep.subr.mxu0 0.0
  %507 = vmatpush2.msra.mxu0 0.0
  %508 = vmatprep.subr.mxu0 0.0
  %509 = vmatpush2.msra.mxu0 0.0
  %510 = vmatprep.subr.mxu0 0.0
  %511 = vmatpush2.msra.mxu0 0.0
  %512 = vmatprep.subr.mxu0 0.0
  %513 = vmatpush2.msra.mxu0 0.0
  %514 = vmatprep.subr.mxu0 0.0
  %515 = vmatpush2.msra.mxu0 0.0
  %516 = vmatprep.subr.mxu0 0.0
  %517 = vmatpush2.msra.mxu0 0.0
  %518 = vmatprep.subr.mxu0 0.0
  %519 = vmatpush2.msra.mxu0 0.0
  %520 = vmatprep.subr.mxu0 0.0
  %521 = vmatpush2.msra.mxu0 0.0
  %522 = vmatprep.subr.mxu0 0.0
  %523 = vmatpush2.msra.mxu0 0.0
  %524 = vmatprep.subr.mxu0 0.0
  %525 = vmatpush2.msra.mxu0 0.0
  %526 = vmatprep.mubr.f32.mxu0 0.0
  %527 = vmatmul.mubr.f32.gmra.mxu0 %v460
  %v528 = vpop.f32.mrf.mxu0
  %v529 = vadd.f32 0.0, %v528
  %v530 = vpop.f32.mrf.mxu0
  %531 = vdwg.mxu0
  %v532 = vpack.c.bf16 %v454, %v454
  %533 = vmatprep.subr.bf16.mxu0 0
  %534 = vmatpush1.bf16.msra.mxu0 %v158
  %535 = vmatprep.subr.bf16.mxu0 0
  %536 = vmatpush1.bf16.msra.mxu0 %v157
  %537 = vmatprep.subr.bf16.mxu0 0
  %538 = vmatpush1.bf16.msra.mxu0 %v156
  %539 = vmatprep.subr.bf16.mxu0 0
  %540 = vmatpush1.bf16.msra.mxu0 %v155
  %541 = vmatprep.subr.bf16.mxu0 0
  %542 = vmatpush1.bf16.msra.mxu0 %v154
  %543 = vmatprep.subr.bf16.mxu0 0
  %544 = vmatpush1.bf16.msra.mxu0 %v153
  %545 = vmatprep.subr.bf16.mxu0 0
  %546 = vmatpush1.bf16.msra.mxu0 %v152
  %547 = vmatprep.subr.bf16.mxu0 0
  %548 = vmatpush1.bf16.msra.mxu0 %v151
  %549 = vmatprep.subr.bf16.mxu0 0
  %550 = vmatpush2.bf16.msra.mxu0 0
  %551 = vmatprep.subr.bf16.mxu0 0
  %552 = vmatpush2.bf16.msra.mxu0 0
  %553 = vmatprep.subr.bf16.mxu0 0
  %554 = vmatpush2.bf16.msra.mxu0 0
  %555 = vmatprep.subr.bf16.mxu0 0
  %556 = vmatpush2.bf16.msra.mxu0 0
  %557 = vmatprep.subr.bf16.mxu0 0
  %558 = vmatpush2.bf16.msra.mxu0 0
  %559 = vmatprep.subr.bf16.mxu0 0
  %560 = vmatpush2.bf16.msra.mxu0 0
  %561 = vmatprep.subr.bf16.mxu0 0
  %562 = vmatpush2.bf16.msra.mxu0 0
  %563 = vmatprep.subr.bf16.mxu0 0
  %564 = vmatpush2.bf16.msra.mxu0 0
  %565 = vmatprep.mubr.bf16.mxu0 0
  %566 = vmatmul.mubr.bf16.gmra.mxu0 %v532
  %v567 = vpop.f32.mrf.mxu0
  %v568 = vadd.f32 %v529, %v567
  %v569 = vpop.f32.mrf.mxu0
  %v570 = vpop.f32.mrf.mxu0
  %v571 = vpop.f32.mrf.mxu0
  %572 = vdwg.mxu0
  %v573 = vmul.f32 %v454, 0.8
  %v574 = vmax.f32 %v568, 0.0
  %v575 = vmul.f32 %v574, 0.2
  %v576 = vadd.f32 %v573, %v575
  %s577 = scalar_lea.vmem %s3, 32
  %578 = vst [vmem:[%s577] sm:$0xff] %v576
  %s579 = scalar_lea.vmem %s2, 32
  %v580 = vld [vmem:[%s579] sm:$0xff]
  %v582 = vsel %vm44, %v580, 0
  %584 = vmatprep.subr.mxu0 0.0
  %585 = vmatpush1.msra.mxu0 0.0
  %586 = vmatprep.subr.mxu0 0.0
  %587 = vmatpush1.msra.mxu0 0.0
  %588 = vmatprep.subr.mxu0 0.0
  %589 = vmatpush1.msra.mxu0 0.0
  %590 = vmatprep.subr.mxu0 0.0
  %591 = vmatpush1.msra.mxu0 0.0
  %592 = vmatprep.subr.mxu0 0.0
  %593 = vmatpush1.msra.mxu0 0.0
  %594 = vmatprep.subr.mxu0 0.0
  %595 = vmatpush1.msra.mxu0 0.0
  %596 = vmatprep.subr.mxu0 0.0
  %597 = vmatpush1.msra.mxu0 0.0
  %598 = vmatprep.subr.mxu0 0.0
  %599 = vmatpush1.msra.mxu0 0.0
  %600 = vmatprep.subr.mxu0 0.0
  %601 = vmatpush1.msra.mxu0 0.0
  %602 = vmatprep.subr.mxu0 0.0
  %603 = vmatpush1.msra.mxu0 0.0
  %604 = vmatprep.subr.mxu0 0.0
  %605 = vmatpush1.msra.mxu0 0.0
  %606 = vmatprep.subr.mxu0 0.0
  %607 = vmatpush1.msra.mxu0 %v40
  %608 = vmatprep.subr.mxu0 0.0
  %609 = vmatpush1.msra.mxu0 %v39
  %610 = vmatprep.subr.mxu0 0.0
  %611 = vmatpush1.msra.mxu0 %v38
  %612 = vmatprep.subr.mxu0 0.0
  %613 = vmatpush1.msra.mxu0 %v37
  %614 = vmatprep.subr.mxu0 0.0
  %615 = vmatpush1.msra.mxu0 %v36
  %616 = vmatprep.subr.mxu0 0.0
  %617 = vmatpush2.msra.mxu0 0.0
  %618 = vmatprep.subr.mxu0 0.0
  %619 = vmatpush2.msra.mxu0 0.0
  %620 = vmatprep.subr.mxu0 0.0
  %621 = vmatpush2.msra.mxu0 0.0
  %622 = vmatprep.subr.mxu0 0.0
  %623 = vmatpush2.msra.mxu0 0.0
  %624 = vmatprep.subr.mxu0 0.0
  %625 = vmatpush2.msra.mxu0 0.0
  %626 = vmatprep.subr.mxu0 0.0
  %627 = vmatpush2.msra.mxu0 0.0
  %628 = vmatprep.subr.mxu0 0.0
  %629 = vmatpush2.msra.mxu0 0.0
  %630 = vmatprep.subr.mxu0 0.0
  %631 = vmatpush2.msra.mxu0 0.0
  %632 = vmatprep.subr.mxu0 0.0
  %633 = vmatpush2.msra.mxu0 0.0
  %634 = vmatprep.subr.mxu0 0.0
  %635 = vmatpush2.msra.mxu0 0.0
  %636 = vmatprep.subr.mxu0 0.0
  %637 = vmatpush2.msra.mxu0 0.0
  %638 = vmatprep.subr.mxu0 0.0
  %639 = vmatpush2.msra.mxu0 0.0
  %640 = vmatprep.subr.mxu0 0.0
  %641 = vmatpush2.msra.mxu0 0.0
  %642 = vmatprep.subr.mxu0 0.0
  %643 = vmatpush2.msra.mxu0 0.0
  %644 = vmatprep.subr.mxu0 0.0
  %645 = vmatpush2.msra.mxu0 0.0
  %646 = vmatprep.subr.mxu0 0.0
  %647 = vmatpush2.msra.mxu0 0.0
  %648 = vmatprep.mubr.f32.mxu0 0.0
  %649 = vmatmul.mubr.f32.gmra.mxu0 %v582
  %v650 = vpop.f32.mrf.mxu0
  %v651 = vadd.f32 0.0, %v650
  %v652 = vpop.f32.mrf.mxu0
  %653 = vdwg.mxu0
  %v654 = vpack.c.bf16 %v576, %v576
  %655 = vmatprep.subr.bf16.mxu0 0
  %656 = vmatpush1.bf16.msra.mxu0 %v158
  %657 = vmatprep.subr.bf16.mxu0 0
  %658 = vmatpush1.bf16.msra.mxu0 %v157
  %659 = vmatprep.subr.bf16.mxu0 0
  %660 = vmatpush1.bf16.msra.mxu0 %v156
  %661 = vmatprep.subr.bf16.mxu0 0
  %662 = vmatpush1.bf16.msra.mxu0 %v155
  %663 = vmatprep.subr.bf16.mxu0 0
  %664 = vmatpush1.bf16.msra.mxu0 %v154
  %665 = vmatprep.subr.bf16.mxu0 0
  %666 = vmatpush1.bf16.msra.mxu0 %v153
  %667 = vmatprep.subr.bf16.mxu0 0
  %668 = vmatpush1.bf16.msra.mxu0 %v152
  %669 = vmatprep.subr.bf16.mxu0 0
  %670 = vmatpush1.bf16.msra.mxu0 %v151
  %671 = vmatprep.subr.bf16.mxu0 0
  %672 = vmatpush2.bf16.msra.mxu0 0
  %673 = vmatprep.subr.bf16.mxu0 0
  %674 = vmatpush2.bf16.msra.mxu0 0
  %675 = vmatprep.subr.bf16.mxu0 0
  %676 = vmatpush2.bf16.msra.mxu0 0
  %677 = vmatprep.subr.bf16.mxu0 0
  %678 = vmatpush2.bf16.msra.mxu0 0
  %679 = vmatprep.subr.bf16.mxu0 0
  %680 = vmatpush2.bf16.msra.mxu0 0
  %681 = vmatprep.subr.bf16.mxu0 0
  %682 = vmatpush2.bf16.msra.mxu0 0
  %683 = vmatprep.subr.bf16.mxu0 0
  %684 = vmatpush2.bf16.msra.mxu0 0
  %685 = vmatprep.subr.bf16.mxu0 0
  %686 = vmatpush2.bf16.msra.mxu0 0
  %687 = vmatprep.mubr.bf16.mxu0 0
  %688 = vmatmul.mubr.bf16.gmra.mxu0 %v654
  %v689 = vpop.f32.mrf.mxu0
  %v690 = vadd.f32 %v651, %v689
  %v691 = vpop.f32.mrf.mxu0
  %v692 = vpop.f32.mrf.mxu0
  %v693 = vpop.f32.mrf.mxu0
  %694 = vdwg.mxu0
  %v695 = vmul.f32 %v576, 0.8
  %v696 = vmax.f32 %v690, 0.0
  %v697 = vmul.f32 %v696, 0.2
  %v698 = vadd.f32 %v695, %v697
  %s699 = scalar_lea.vmem %s3, 40
  %700 = vst [vmem:[%s699] sm:$0xff] %v698
  %s701 = scalar_lea.vmem %s2, 40
  %v702 = vld [vmem:[%s701] sm:$0xff]
  %v704 = vsel %vm44, %v702, 0
  %706 = vmatprep.subr.mxu0 0.0
  %707 = vmatpush1.msra.mxu0 0.0
  %708 = vmatprep.subr.mxu0 0.0
  %709 = vmatpush1.msra.mxu0 0.0
  %710 = vmatprep.subr.mxu0 0.0
  %711 = vmatpush1.msra.mxu0 0.0
  %712 = vmatprep.subr.mxu0 0.0
  %713 = vmatpush1.msra.mxu0 0.0
  %714 = vmatprep.subr.mxu0 0.0
  %715 = vmatpush1.msra.mxu0 0.0
  %716 = vmatprep.subr.mxu0 0.0
  %717 = vmatpush1.msra.mxu0 0.0
  %718 = vmatprep.subr.mxu0 0.0
  %719 = vmatpush1.msra.mxu0 0.0
  %720 = vmatprep.subr.mxu0 0.0
  %721 = vmatpush1.msra.mxu0 0.0
  %722 = vmatprep.subr.mxu0 0.0
  %723 = vmatpush1.msra.mxu0 0.0
  %724 = vmatprep.subr.mxu0 0.0
  %725 = vmatpush1.msra.mxu0 0.0
  %726 = vmatprep.subr.mxu0 0.0
  %727 = vmatpush1.msra.mxu0 0.0
  %728 = vmatprep.subr.mxu0 0.0
  %729 = vmatpush1.msra.mxu0 %v40
  %730 = vmatprep.subr.mxu0 0.0
  %731 = vmatpush1.msra.mxu0 %v39
  %732 = vmatprep.subr.mxu0 0.0
  %733 = vmatpush1.msra.mxu0 %v38
  %734 = vmatprep.subr.mxu0 0.0
  %735 = vmatpush1.msra.mxu0 %v37
  %736 = vmatprep.subr.mxu0 0.0
  %737 = vmatpush1.msra.mxu0 %v36
  %738 = vmatprep.subr.mxu0 0.0
  %739 = vmatpush2.msra.mxu0 0.0
  %740 = vmatprep.subr.mxu0 0.0
  %741 = vmatpush2.msra.mxu0 0.0
  %742 = vmatprep.subr.mxu0 0.0
  %743 = vmatpush2.msra.mxu0 0.0
  %744 = vmatprep.subr.mxu0 0.0
  %745 = vmatpush2.msra.mxu0 0.0
  %746 = vmatprep.subr.mxu0 0.0
  %747 = vmatpush2.msra.mxu0 0.0
  %748 = vmatprep.subr.mxu0 0.0
  %749 = vmatpush2.msra.mxu0 0.0
  %750 = vmatprep.subr.mxu0 0.0
  %751 = vmatpush2.msra.mxu0 0.0
  %752 = vmatprep.subr.mxu0 0.0
  %753 = vmatpush2.msra.mxu0 0.0
  %754 = vmatprep.subr.mxu0 0.0
  %755 = vmatpush2.msra.mxu0 0.0
  %756 = vmatprep.subr.mxu0 0.0
  %757 = vmatpush2.msra.mxu0 0.0
  %758 = vmatprep.subr.mxu0 0.0
  %759 = vmatpush2.msra.mxu0 0.0
  %760 = vmatprep.subr.mxu0 0.0
  %761 = vmatpush2.msra.mxu0 0.0
  %762 = vmatprep.subr.mxu0 0.0
  %763 = vmatpush2.msra.mxu0 0.0
  %764 = vmatprep.subr.mxu0 0.0
  %765 = vmatpush2.msra.mxu0 0.0
  %766 = vmatprep.subr.mxu0 0.0
  %767 = vmatpush2.msra.mxu0 0.0
  %768 = vmatprep.subr.mxu0 0.0
  %769 = vmatpush2.msra.mxu0 0.0
  %770 = vmatprep.mubr.f32.mxu0 0.0
  %771 = vmatmul.mubr.f32.gmra.mxu0 %v704
  %v772 = vpop.f32.mrf.mxu0
  %v773 = vadd.f32 0.0, %v772
  %v774 = vpop.f32.mrf.mxu0
  %775 = vdwg.mxu0
  %v776 = vpack.c.bf16 %v698, %v698
  %777 = vmatprep.subr.bf16.mxu0 0
  %778 = vmatpush1.bf16.msra.mxu0 %v158
  %779 = vmatprep.subr.bf16.mxu0 0
  %780 = vmatpush1.bf16.msra.mxu0 %v157
  %781 = vmatprep.subr.bf16.mxu0 0
  %782 = vmatpush1.bf16.msra.mxu0 %v156
  %783 = vmatprep.subr.bf16.mxu0 0
  %784 = vmatpush1.bf16.msra.mxu0 %v155
  %785 = vmatprep.subr.bf16.mxu0 0
  %786 = vmatpush1.bf16.msra.mxu0 %v154
  %787 = vmatprep.subr.bf16.mxu0 0
  %788 = vmatpush1.bf16.msra.mxu0 %v153
  %789 = vmatprep.subr.bf16.mxu0 0
  %790 = vmatpush1.bf16.msra.mxu0 %v152
  %791 = vmatprep.subr.bf16.mxu0 0
  %792 = vmatpush1.bf16.msra.mxu0 %v151
  %793 = vmatprep.subr.bf16.mxu0 0
  %794 = vmatpush2.bf16.msra.mxu0 0
  %795 = vmatprep.subr.bf16.mxu0 0
  %796 = vmatpush2.bf16.msra.mxu0 0
  %797 = vmatprep.subr.bf16.mxu0 0
  %798 = vmatpush2.bf16.msra.mxu0 0
  %799 = vmatprep.subr.bf16.mxu0 0
  %800 = vmatpush2.bf16.msra.mxu0 0
  %801 = vmatprep.subr.bf16.mxu0 0
  %802 = vmatpush2.bf16.msra.mxu0 0
  %803 = vmatprep.subr.bf16.mxu0 0
  %804 = vmatpush2.bf16.msra.mxu0 0
  %805 = vmatprep.subr.bf16.mxu0 0
  %806 = vmatpush2.bf16.msra.mxu0 0
  %807 = vmatprep.subr.bf16.mxu0 0
  %808 = vmatpush2.bf16.msra.mxu0 0
  %809 = vmatprep.mubr.bf16.mxu0 0
  %810 = vmatmul.mubr.bf16.gmra.mxu0 %v776
  %v811 = vpop.f32.mrf.mxu0
  %v812 = vadd.f32 %v773, %v811
  %v813 = vpop.f32.mrf.mxu0
  %v814 = vpop.f32.mrf.mxu0
  %v815 = vpop.f32.mrf.mxu0
  %816 = vdwg.mxu0
  %v817 = vmul.f32 %v698, 0.8
  %v818 = vmax.f32 %v812, 0.0
  %v819 = vmul.f32 %v818, 0.2
  %v820 = vadd.f32 %v817, %v819
  %s821 = scalar_lea.vmem %s3, 48
  %822 = vst [vmem:[%s821] sm:$0xff] %v820
  %s823 = scalar_lea.vmem %s2, 48
  %v824 = vld [vmem:[%s823] sm:$0xff]
  %v826 = vsel %vm44, %v824, 0
  %828 = vmatprep.subr.mxu0 0.0
  %829 = vmatpush1.msra.mxu0 0.0
  %830 = vmatprep.subr.mxu0 0.0
  %831 = vmatpush1.msra.mxu0 0.0
  %832 = vmatprep.subr.mxu0 0.0
  %833 = vmatpush1.msra.mxu0 0.0
  %834 = vmatprep.subr.mxu0 0.0
  %835 = vmatpush1.msra.mxu0 0.0
  %836 = vmatprep.subr.mxu0 0.0
  %837 = vmatpush1.msra.mxu0 0.0
  %838 = vmatprep.subr.mxu0 0.0
  %839 = vmatpush1.msra.mxu0 0.0
  %840 = vmatprep.subr.mxu0 0.0
  %841 = vmatpush1.msra.mxu0 0.0
  %842 = vmatprep.subr.mxu0 0.0
  %843 = vmatpush1.msra.mxu0 0.0
  %844 = vmatprep.subr.mxu0 0.0
  %845 = vmatpush1.msra.mxu0 0.0
  %846 = vmatprep.subr.mxu0 0.0
  %847 = vmatpush1.msra.mxu0 0.0
  %848 = vmatprep.subr.mxu0 0.0
  %849 = vmatpush1.msra.mxu0 0.0
  %850 = vmatprep.subr.mxu0 0.0
  %851 = vmatpush1.msra.mxu0 %v40
  %852 = vmatprep.subr.mxu0 0.0
  %853 = vmatpush1.msra.mxu0 %v39
  %854 = vmatprep.subr.mxu0 0.0
  %855 = vmatpush1.msra.mxu0 %v38
  %856 = vmatprep.subr.mxu0 0.0
  %857 = vmatpush1.msra.mxu0 %v37
  %858 = vmatprep.subr.mxu0 0.0
  %859 = vmatpush1.msra.mxu0 %v36
  %860 = vmatprep.subr.mxu0 0.0
  %861 = vmatpush2.msra.mxu0 0.0
  %862 = vmatprep.subr.mxu0 0.0
  %863 = vmatpush2.msra.mxu0 0.0
  %864 = vmatprep.subr.mxu0 0.0
  %865 = vmatpush2.msra.mxu0 0.0
  %866 = vmatprep.subr.mxu0 0.0
  %867 = vmatpush2.msra.mxu0 0.0
  %868 = vmatprep.subr.mxu0 0.0
  %869 = vmatpush2.msra.mxu0 0.0
  %870 = vmatprep.subr.mxu0 0.0
  %871 = vmatpush2.msra.mxu0 0.0
  %872 = vmatprep.subr.mxu0 0.0
  %873 = vmatpush2.msra.mxu0 0.0
  %874 = vmatprep.subr.mxu0 0.0
  %875 = vmatpush2.msra.mxu0 0.0
  %876 = vmatprep.subr.mxu0 0.0
  %877 = vmatpush2.msra.mxu0 0.0
  %878 = vmatprep.subr.mxu0 0.0
  %879 = vmatpush2.msra.mxu0 0.0
  %880 = vmatprep.subr.mxu0 0.0
  %881 = vmatpush2.msra.mxu0 0.0
  %882 = vmatprep.subr.mxu0 0.0
  %883 = vmatpush2.msra.mxu0 0.0
  %884 = vmatprep.subr.mxu0 0.0
  %885 = vmatpush2.msra.mxu0 0.0
  %886 = vmatprep.subr.mxu0 0.0
  %887 = vmatpush2.msra.mxu0 0.0
  %888 = vmatprep.subr.mxu0 0.0
  %889 = vmatpush2.msra.mxu0 0.0
  %890 = vmatprep.subr.mxu0 0.0
  %891 = vmatpush2.msra.mxu0 0.0
  %892 = vmatprep.mubr.f32.mxu0 0.0
  %893 = vmatmul.mubr.f32.gmra.mxu0 %v826
  %v894 = vpop.f32.mrf.mxu0
  %v895 = vadd.f32 0.0, %v894
  %v896 = vpop.f32.mrf.mxu0
  %897 = vdwg.mxu0
  %v898 = vpack.c.bf16 %v820, %v820
  %899 = vmatprep.subr.bf16.mxu0 0
  %900 = vmatpush1.bf16.msra.mxu0 %v158
  %901 = vmatprep.subr.bf16.mxu0 0
  %902 = vmatpush1.bf16.msra.mxu0 %v157
  %903 = vmatprep.subr.bf16.mxu0 0
  %904 = vmatpush1.bf16.msra.mxu0 %v156
  %905 = vmatprep.subr.bf16.mxu0 0
  %906 = vmatpush1.bf16.msra.mxu0 %v155
  %907 = vmatprep.subr.bf16.mxu0 0
  %908 = vmatpush1.bf16.msra.mxu0 %v154
  %909 = vmatprep.subr.bf16.mxu0 0
  %910 = vmatpush1.bf16.msra.mxu0 %v153
  %911 = vmatprep.subr.bf16.mxu0 0
  %912 = vmatpush1.bf16.msra.mxu0 %v152
  %913 = vmatprep.subr.bf16.mxu0 0
  %914 = vmatpush1.bf16.msra.mxu0 %v151
  %915 = vmatprep.subr.bf16.mxu0 0
  %916 = vmatpush2.bf16.msra.mxu0 0
  %917 = vmatprep.subr.bf16.mxu0 0
  %918 = vmatpush2.bf16.msra.mxu0 0
  %919 = vmatprep.subr.bf16.mxu0 0
  %920 = vmatpush2.bf16.msra.mxu0 0
  %921 = vmatprep.subr.bf16.mxu0 0
  %922 = vmatpush2.bf16.msra.mxu0 0
  %923 = vmatprep.subr.bf16.mxu0 0
  %924 = vmatpush2.bf16.msra.mxu0 0
  %925 = vmatprep.subr.bf16.mxu0 0
  %926 = vmatpush2.bf16.msra.mxu0 0
  %927 = vmatprep.subr.bf16.mxu0 0
  %928 = vmatpush2.bf16.msra.mxu0 0
  %929 = vmatprep.subr.bf16.mxu0 0
  %930 = vmatpush2.bf16.msra.mxu0 0
  %931 = vmatprep.mubr.bf16.mxu0 0
  %932 = vmatmul.mubr.bf16.gmra.mxu0 %v898
  %v933 = vpop.f32.mrf.mxu0
  %v934 = vadd.f32 %v895, %v933
  %v935 = vpop.f32.mrf.mxu0
  %v936 = vpop.f32.mrf.mxu0
  %v937 = vpop.f32.mrf.mxu0
  %938 = vdwg.mxu0
  %v939 = vmul.f32 %v820, 0.8
  %v940 = vmax.f32 %v934, 0.0
  %v941 = vmul.f32 %v940, 0.2
  %v942 = vadd.f32 %v939, %v941
  %s943 = scalar_lea.vmem %s3, 56
  %944 = vst [vmem:[%s943] sm:$0xff] %v942
  %s945 = scalar_lea.vmem %s2, 56
  %v946 = vld [vmem:[%s945] sm:$0xff]
  %v948 = vsel %vm44, %v946, 0
  %950 = vmatprep.subr.mxu0 0.0
  %951 = vmatpush1.msra.mxu0 0.0
  %952 = vmatprep.subr.mxu0 0.0
  %953 = vmatpush1.msra.mxu0 0.0
  %954 = vmatprep.subr.mxu0 0.0
  %955 = vmatpush1.msra.mxu0 0.0
  %956 = vmatprep.subr.mxu0 0.0
  %957 = vmatpush1.msra.mxu0 0.0
  %958 = vmatprep.subr.mxu0 0.0
  %959 = vmatpush1.msra.mxu0 0.0
  %960 = vmatprep.subr.mxu0 0.0
  %961 = vmatpush1.msra.mxu0 0.0
  %962 = vmatprep.subr.mxu0 0.0
  %963 = vmatpush1.msra.mxu0 0.0
  %964 = vmatprep.subr.mxu0 0.0
  %965 = vmatpush1.msra.mxu0 0.0
  %966 = vmatprep.subr.mxu0 0.0
  %967 = vmatpush1.msra.mxu0 0.0
  %968 = vmatprep.subr.mxu0 0.0
  %969 = vmatpush1.msra.mxu0 0.0
  %970 = vmatprep.subr.mxu0 0.0
  %971 = vmatpush1.msra.mxu0 0.0
  %972 = vmatprep.subr.mxu0 0.0
  %973 = vmatpush1.msra.mxu0 %v40
  %974 = vmatprep.subr.mxu0 0.0
  %975 = vmatpush1.msra.mxu0 %v39
  %976 = vmatprep.subr.mxu0 0.0
  %977 = vmatpush1.msra.mxu0 %v38
  %978 = vmatprep.subr.mxu0 0.0
  %979 = vmatpush1.msra.mxu0 %v37
  %980 = vmatprep.subr.mxu0 0.0
  %981 = vmatpush1.msra.mxu0 %v36
  %982 = vmatprep.subr.mxu0 0.0
  %983 = vmatpush2.msra.mxu0 0.0
  %984 = vmatprep.subr.mxu0 0.0
  %985 = vmatpush2.msra.mxu0 0.0
  %986 = vmatprep.subr.mxu0 0.0
  %987 = vmatpush2.msra.mxu0 0.0
  %988 = vmatprep.subr.mxu0 0.0
  %989 = vmatpush2.msra.mxu0 0.0
  %990 = vmatprep.subr.mxu0 0.0
  %991 = vmatpush2.msra.mxu0 0.0
  %992 = vmatprep.subr.mxu0 0.0
  %993 = vmatpush2.msra.mxu0 0.0
  %994 = vmatprep.subr.mxu0 0.0
  %995 = vmatpush2.msra.mxu0 0.0
  %996 = vmatprep.subr.mxu0 0.0
  %997 = vmatpush2.msra.mxu0 0.0
  %998 = vmatprep.subr.mxu0 0.0
  %999 = vmatpush2.msra.mxu0 0.0
  %1000 = vmatprep.subr.mxu0 0.0
  %1001 = vmatpush2.msra.mxu0 0.0
  %1002 = vmatprep.subr.mxu0 0.0
  %1003 = vmatpush2.msra.mxu0 0.0
  %1004 = vmatprep.subr.mxu0 0.0
  %1005 = vmatpush2.msra.mxu0 0.0
  %1006 = vmatprep.subr.mxu0 0.0
  %1007 = vmatpush2.msra.mxu0 0.0
  %1008 = vmatprep.subr.mxu0 0.0
  %1009 = vmatpush2.msra.mxu0 0.0
  %1010 = vmatprep.subr.mxu0 0.0
  %1011 = vmatpush2.msra.mxu0 0.0
  %1012 = vmatprep.subr.mxu0 0.0
  %1013 = vmatpush2.msra.mxu0 0.0
  %1014 = vmatprep.mubr.f32.mxu0 0.0
  %1015 = vmatmul.mubr.f32.gmra.mxu0 %v948
  %v1016 = vpop.f32.mrf.mxu0
  %v1017 = vadd.f32 0.0, %v1016
  %v1018 = vpop.f32.mrf.mxu0
  %1019 = vdwg.mxu0
  %v1020 = vpack.c.bf16 %v942, %v942
  %1021 = vmatprep.subr.bf16.mxu0 0
  %1022 = vmatpush1.bf16.msra.mxu0 %v158
  %1023 = vmatprep.subr.bf16.mxu0 0
  %1024 = vmatpush1.bf16.msra.mxu0 %v157
  %1025 = vmatprep.subr.bf16.mxu0 0
  %1026 = vmatpush1.bf16.msra.mxu0 %v156
  %1027 = vmatprep.subr.bf16.mxu0 0
  %1028 = vmatpush1.bf16.msra.mxu0 %v155
  %1029 = vmatprep.subr.bf16.mxu0 0
  %1030 = vmatpush1.bf16.msra.mxu0 %v154
  %1031 = vmatprep.subr.bf16.mxu0 0
  %1032 = vmatpush1.bf16.msra.mxu0 %v153
  %1033 = vmatprep.subr.bf16.mxu0 0
  %1034 = vmatpush1.bf16.msra.mxu0 %v152
  %1035 = vmatprep.subr.bf16.mxu0 0
  %1036 = vmatpush1.bf16.msra.mxu0 %v151
  %1037 = vmatprep.subr.bf16.mxu0 0
  %1038 = vmatpush2.bf16.msra.mxu0 0
  %1039 = vmatprep.subr.bf16.mxu0 0
  %1040 = vmatpush2.bf16.msra.mxu0 0
  %1041 = vmatprep.subr.bf16.mxu0 0
  %1042 = vmatpush2.bf16.msra.mxu0 0
  %1043 = vmatprep.subr.bf16.mxu0 0
  %1044 = vmatpush2.bf16.msra.mxu0 0
  %1045 = vmatprep.subr.bf16.mxu0 0
  %1046 = vmatpush2.bf16.msra.mxu0 0
  %1047 = vmatprep.subr.bf16.mxu0 0
  %1048 = vmatpush2.bf16.msra.mxu0 0
  %1049 = vmatprep.subr.bf16.mxu0 0
  %1050 = vmatpush2.bf16.msra.mxu0 0
  %1051 = vmatprep.subr.bf16.mxu0 0
  %1052 = vmatpush2.bf16.msra.mxu0 0
  %1053 = vmatprep.mubr.bf16.mxu0 0
  %1054 = vmatmul.mubr.bf16.gmra.mxu0 %v1020
  %v1055 = vpop.f32.mrf.mxu0
  %v1056 = vadd.f32 %v1017, %v1055
  %v1057 = vpop.f32.mrf.mxu0
  %v1058 = vpop.f32.mrf.mxu0
  %v1059 = vpop.f32.mrf.mxu0
  %1060 = vdwg.mxu0
  %v1061 = vmul.f32 %v942, 0.8
  %v1062 = vmax.f32 %v1056, 0.0
  %v1063 = vmul.f32 %v1062, 0.2
  %v1064 = vadd.f32 %v1061, %v1063
  %1065 = vst [vmem:[#allocation2] sm:$0xff] %v1064
  // Predicated region
  $region18: #{net2_forward.1} parent=0 // pred_check
    _
  $region19: #{net2_forward.1} parent=0 // pred_check_branch
    %1067 = sbr.rel (0) target = $region21
  $region20: #{net2_forward.1} parent=0 // pred_region
    _
  $region21: #{net2_forward.1} parent=0 // pred_fallthru
    _
  // Predicated region
  $region22: #{net2_forward.1} parent=0 // pred_check
    _
  $region23: #{net2_forward.1} parent=0 // pred_check_branch
    %1069 = sbr.rel (0) target = $region25
  $region24: #{net2_forward.1} parent=0 // pred_region
    _
  $region25: #{net2_forward.1} parent=0 // pred_fallthru
    _

</llo_original>
